<compile_context>
chip_gen: v7x
topology: tpu7x:2x2x1
jax: 0.10.0
libtpu: 0.0.40
codegen_flags: <defaults>
</compile_context>

<pallas_src>
import jax
import jax.numpy as jnp
from jax.experimental import pallas as pl
from jax.experimental.pallas import tpu as pltpu

_LANE = 128


def _round_up(n, m):
    return ((n + m - 1) // m) * m


def _mlp_kernel(x_ref, *refs):
    """Full MLP forward for one batch tile.

    x_ref : (TB, input_c)                  VMEM, compute dtype (real width)
    refs  : (W0, b0, ..., W4, b4, o_ref)   VMEM
            Wk : (pad_in_k, pad_out_k)     compute dtype, constant across steps
            bk : (1, pad_out_k)            float32
            o  : (TB, output_c)            float32 (real width)
    """
    o_ref = refs[-1]
    param_refs = refs[:-1]
    n_layers = len(param_refs) // 2
    cdt = param_refs[0].dtype              # compute dtype (bf16 or f32)

    h = x_ref[...].astype(cdt)
    pad_in = param_refs[0].shape[0]
    if h.shape[1] < pad_in:
        # Zero-pad the input features to the padded contraction width inside
        # VMEM (no HBM amplification).  Zero padding is mathematically inert.
        h = jnp.concatenate(
            [h, jnp.zeros((h.shape[0], pad_in - h.shape[1]), cdt)], axis=-1)

    for i in range(n_layers):
        w_ref = param_refs[2 * i]
        b_ref = param_refs[2 * i + 1]
        # MXU matmul with f32 accumulation; bias-add + ReLU in f32 on the VPU
        # (v5e has no bf16 VPU, so the epilogue stays f32 on all gens).
        y = jnp.dot(h, w_ref[...], preferred_element_type=jnp.float32)
        y = y + b_ref[...]
        if i < n_layers - 1:
            h = jnp.maximum(y, 0.0).astype(cdt)
        else:
            h = y                           # final layer: no activation
    # Store only the real output columns (lane-masked store of 9 f32 lanes).
    o_ref[...] = h[:, :o_ref.shape[1]].astype(o_ref.dtype)


def prepare_params(params, compute_dtype=jnp.bfloat16):
    """Pad + cast parameters ONCE (hoisted out of the per-call hot path).

    params : list of (W, b) with W shaped (in_k, out_k) (transpose of torch
             Linear.weight), b shaped (out_k,).
    Returns a dict consumed by pure_mlp_forward; reuse it across calls.
    """
    dims = [params[0][0].shape[0]] + [w.shape[1] for (w, _) in params]
    pdims = [_round_up(d, _LANE) for d in dims]

    flat = []
    for k, (w, b) in enumerate(params):
        in_k, out_k = w.shape
        wp = jnp.zeros((pdims[k], pdims[k + 1]), compute_dtype)
        wp = wp.at[:in_k, :out_k].set(jnp.asarray(w, compute_dtype))
        bp = jnp.zeros((1, pdims[k + 1]), jnp.float32)
        bp = bp.at[0, :out_k].set(jnp.asarray(b, jnp.float32))
        flat += [wp, bp]

    return {
        "flat": tuple(flat),
        "input_c": int(dims[0]),
        "output_c": int(dims[-1]),
        "compute_dtype": jnp.dtype(compute_dtype),
    }


def pure_mlp_forward(x, prepared, *, batch_tile=None, batch_tile_cap=1024):
    """Run the pure_MLP forward pass as a single Pallas kernel.

    x        : (B, input_c) float array
    prepared : output of prepare_params (padded, cast weights/biases)
    """
    flat_args = prepared["flat"]
    input_c = prepared["input_c"]
    output_c = prepared["output_c"]
    cdt = prepared["compute_dtype"]

    B, in_c = x.shape
    assert in_c == input_c, (in_c, input_c)

    # Sublane granularity: 16 for sub-32-bit compute dtypes, else 8.
    sub = 16 if jnp.dtype(cdt).itemsize < 4 else 8

    # ---- batch tiling: whole batch if it fits the cap; otherwise an even
    # ---- number of tiles so the 'parallel' axis shards across both v7x TCs.
    if batch_tile is None:
        if B <= batch_tile_cap:
            tiles = 1
            batch_tile = _round_up(B, sub)
        else:
            tiles = pl.cdiv(B, batch_tile_cap)
            if tiles % 2:
                tiles += 1
            batch_tile = _round_up(pl.cdiv(B, tiles), sub)
    else:
        batch_tile = _round_up(batch_tile, sub)
        tiles = pl.cdiv(B, batch_tile)
    Bp = tiles * batch_tile
    grid = (tiles,)

    # ---- cast once; batch-pad only if needed (feature dim stays REAL width).
    xc = x.astype(cdt)
    if Bp != B:
        xc = jnp.zeros((Bp, input_c), cdt).at[:B].set(xc)

    x_spec = pl.BlockSpec((batch_tile, input_c), lambda i: (i, 0))
    out_spec = pl.BlockSpec((batch_tile, output_c), lambda i: (i, 0))
    param_specs = [pl.BlockSpec(a.shape, lambda i: (0, 0)) for a in flat_args]

    # ---- advisory cost estimate (real HBM bytes, padded/executed flops) ----
    flops = 2 * Bp * sum(flat_args[2 * k].shape[0] * flat_args[2 * k].shape[1]
                         for k in range(len(flat_args) // 2))
    bytes_accessed = (Bp * input_c * jnp.dtype(cdt).itemsize     # x
                      + Bp * output_c * 4                        # out (f32)
                      + sum(int(a.size) * a.dtype.itemsize for a in flat_args))
    cost = pl.CostEstimate(flops=flops, transcendentals=0,
                           bytes_accessed=bytes_accessed)

    out = pl.pallas_call(
        _mlp_kernel,
        out_shape=jax.ShapeDtypeStruct((Bp, output_c), jnp.float32),
        grid_spec=pltpu.PrefetchScalarGridSpec(
            num_scalar_prefetch=0,
            grid=grid,
            in_specs=[x_spec] + param_specs,
            out_specs=out_spec,
        ),
        compiler_params=pltpu.CompilerParams(
            dimension_semantics=("parallel",),
            vmem_limit_bytes=32 * 1024 * 1024),
        cost_estimate=cost,
    )(xc, *flat_args)

    return out[:B] if Bp != B else out


def init_params(key, input_c, output_c, h_layers=None):
    """Deterministic parameter init matching pure_MLP's layer shapes.

    Returns list of (W, b) with W as (in_features, out_features).
    """
    if h_layers is None:
        h_layers = [250, 130, 50, 25]
    dims = [input_c] + list(h_layers) + [output_c]
    params = []
    for i in range(len(dims) - 1):
        fan_in, fan_out = dims[i], dims[i + 1]
        key, kw, kb = jax.random.split(key, 3)
        bound = 1.0 / jnp.sqrt(jnp.float32(fan_in))   # torch Linear default range
        w = jax.random.uniform(kw, (fan_in, fan_out), jnp.float32, -bound, bound)
        b = jax.random.uniform(kb, (fan_out,), jnp.float32, -bound, bound)
        params.append((w, b))
    return params


def mlp_reference(x, params):
    """Pure-JAX reference of the same forward pass."""
    h = x
    for i, (w, b) in enumerate(params):
        h = h @ w + b
        if i < len(params) - 1:
            h = jnp.maximum(h, 0.0)
    return h


# TODO(synk): load_model (torch checkpoint loading) has no in-kernel
# equivalent; parameters are generated in-script instead.

if __name__ == "__main__":
    key = jax.random.PRNGKey(0)
    k_x, k_p = jax.random.split(key)

    # Small shapes consistent with the module: input_c=10, output_c=9, batch=16.
    B, input_c, output_c = 16, 10, 9
    x = jax.random.normal(k_x, (B, input_c), jnp.float32)
    params = init_params(k_p, input_c, output_c)

    ref = mlp_reference(x, params)

    # Default fast path: bf16 weights/activations, f32 accumulation/epilogue.
    prep_bf16 = prepare_params(params)                      # prepared once
    out_bf16 = jax.block_until_ready(pure_mlp_forward(x, prep_bf16))
    assert out_bf16.shape == (B, output_c), out_bf16.shape
    assert jnp.allclose(out_bf16, ref, atol=5e-2, rtol=5e-2), \
        "bf16 mismatch vs reference"

    # f32 path: tight tolerance vs. reference.
    prep_f32 = prepare_params(params, compute_dtype=jnp.float32)
    out_f32 = jax.block_until_ready(pure_mlp_forward(x, prep_f32))
    assert out_f32.shape == (B, output_c), out_f32.shape
    assert jnp.allclose(out_f32, ref, atol=1e-4, rtol=1e-4), \
        "f32 mismatch vs reference"

    print("KERNEL_OK")
</pallas_src>

<mosaic_0001>
module attributes {stable_mosaic.version = 11 : i64} {
  func.func @_mlp_kernel(%arg0: i32, %arg1: memref<16x10xbf16, #tpu.memory_space<vmem>>, %arg2: memref<128x256xbf16, #tpu.memory_space<vmem>>, %arg3: memref<1x256xf32, #tpu.memory_space<vmem>>, %arg4: memref<256x256xbf16, #tpu.memory_space<vmem>>, %arg5: memref<1x256xf32, #tpu.memory_space<vmem>>, %arg6: memref<256x128xbf16, #tpu.memory_space<vmem>>, %arg7: memref<1x128xf32, #tpu.memory_space<vmem>>, %arg8: memref<128x128xbf16, #tpu.memory_space<vmem>>, %arg9: memref<1x128xf32, #tpu.memory_space<vmem>>, %arg10: memref<128x128xbf16, #tpu.memory_space<vmem>>, %arg11: memref<1x128xf32, #tpu.memory_space<vmem>>, %arg12: memref<16x9xf32, #tpu.memory_space<vmem>>) attributes {dimension_semantics = [#tpu.dimension_semantics<parallel>], iteration_bounds = array<i64: 1>, scalar_prefetch = 0 : i64, scratch_operands = 0 : i64, tpu.core_type = #tpu.core_type<tc>, window_params = [{transform_indices = @transform_0, window_bounds = array<i64: 16, 10>}, {pipeline_mode = #tpu.pipeline_mode<synchronous>, transform_indices = @transform_1, window_bounds = array<i64: 128, 256>}, {pipeline_mode = #tpu.pipeline_mode<synchronous>, transform_indices = @transform_2, window_bounds = array<i64: 1, 256>}, {pipeline_mode = #tpu.pipeline_mode<synchronous>, transform_indices = @transform_3, window_bounds = array<i64: 256, 256>}, {pipeline_mode = #tpu.pipeline_mode<synchronous>, transform_indices = @transform_4, window_bounds = array<i64: 1, 256>}, {pipeline_mode = #tpu.pipeline_mode<synchronous>, transform_indices = @transform_5, window_bounds = array<i64: 256, 128>}, {pipeline_mode = #tpu.pipeline_mode<synchronous>, transform_indices = @transform_6, window_bounds = array<i64: 1, 128>}, {pipeline_mode = #tpu.pipeline_mode<synchronous>, transform_indices = @transform_7, window_bounds = array<i64: 128, 128>}, {pipeline_mode = #tpu.pipeline_mode<synchronous>, transform_indices = @transform_8, window_bounds = array<i64: 1, 128>}, {pipeline_mode = #tpu.pipeline_mode<synchronous>, transform_indices = @transform_9, window_bounds = array<i64: 128, 128>}, {pipeline_mode = #tpu.pipeline_mode<synchronous>, transform_indices = @transform_10, window_bounds = array<i64: 1, 128>}, {transform_indices = @transform_11, window_bounds = array<i64: 16, 9>}]} {
    %c0 = arith.constant 0 : index
    %c0_0 = arith.constant 0 : index
    %0 = vector.load %arg1[%c0, %c0_0] : memref<16x10xbf16, #tpu.memory_space<vmem>>, vector<16x10xbf16>
    %cst = arith.constant 0.000000e+00 : bf16
    %1 = vector.broadcast %cst : bf16 to vector<16x118xbf16>
    %2 = tpu.concatenate %0, %1 in 1 : vector<16x10xbf16>, vector<16x118xbf16> -> vector<16x128xbf16>
    %c0_1 = arith.constant 0 : index
    %c0_2 = arith.constant 0 : index
    %3 = vector.load %arg2[%c0_1, %c0_2] : memref<128x256xbf16, #tpu.memory_space<vmem>>, vector<128x256xbf16>
    %cst_3 = arith.constant dense<0.000000e+00> : vector<16x256xf32>
    %4 = tpu.matmul %2, %3, %cst_3 {dimension_numbers = #tpu.dot_dimension_numbers<[1], [0], [0], [1], [0, 0, 1, 1], [], []>} : vector<16x128xbf16>, vector<128x256xbf16>, vector<16x256xf32> -> vector<16x256xf32>
    %c0_4 = arith.constant 0 : index
    %c0_5 = arith.constant 0 : index
    %5 = vector.load %arg3[%c0_4, %c0_5] : memref<1x256xf32, #tpu.memory_space<vmem>>, vector<1x256xf32>
    %6 = vector.broadcast %5 : vector<1x256xf32> to vector<16x256xf32>
    %7 = arith.addf %4, %6 : vector<16x256xf32>
    %cst_6 = arith.constant 0.000000e+00 : f32
    %8 = vector.broadcast %cst_6 : f32 to vector<16x256xf32>
    %9 = arith.maximumf %7, %8 : vector<16x256xf32>
    %10 = arith.truncf %9 : vector<16x256xf32> to vector<16x256xbf16>
    %c0_7 = arith.constant 0 : index
    %c0_8 = arith.constant 0 : index
    %11 = vector.load %arg4[%c0_7, %c0_8] : memref<256x256xbf16, #tpu.memory_space<vmem>>, vector<256x256xbf16>
    %cst_9 = arith.constant dense<0.000000e+00> : vector<16x256xf32>
    %12 = tpu.matmul %10, %11, %cst_9 {dimension_numbers = #tpu.dot_dimension_numbers<[1], [0], [0], [1], [0, 0, 1, 1], [], []>} : vector<16x256xbf16>, vector<256x256xbf16>, vector<16x256xf32> -> vector<16x256xf32>
    %c0_10 = arith.constant 0 : index
    %c0_11 = arith.constant 0 : index
    %13 = vector.load %arg5[%c0_10, %c0_11] : memref<1x256xf32, #tpu.memory_space<vmem>>, vector<1x256xf32>
    %14 = vector.broadcast %13 : vector<1x256xf32> to vector<16x256xf32>
    %15 = arith.addf %12, %14 : vector<16x256xf32>
    %cst_12 = arith.constant 0.000000e+00 : f32
    %16 = vector.broadcast %cst_12 : f32 to vector<16x256xf32>
    %17 = arith.maximumf %15, %16 : vector<16x256xf32>
    %18 = arith.truncf %17 : vector<16x256xf32> to vector<16x256xbf16>
    %c0_13 = arith.constant 0 : index
    %c0_14 = arith.constant 0 : index
    %19 = vector.load %arg6[%c0_13, %c0_14] : memref<256x128xbf16, #tpu.memory_space<vmem>>, vector<256x128xbf16>
    %cst_15 = arith.constant dense<0.000000e+00> : vector<16x128xf32>
    %20 = tpu.matmul %18, %19, %cst_15 {dimension_numbers = #tpu.dot_dimension_numbers<[1], [0], [0], [1], [0, 0, 1, 1], [], []>} : vector<16x256xbf16>, vector<256x128xbf16>, vector<16x128xf32> -> vector<16x128xf32>
    %c0_16 = arith.constant 0 : index
    %c0_17 = arith.constant 0 : index
    %21 = vector.load %arg7[%c0_16, %c0_17] : memref<1x128xf32, #tpu.memory_space<vmem>>, vector<1x128xf32>
    %22 = vector.broadcast %21 : vector<1x128xf32> to vector<16x128xf32>
    %23 = arith.addf %20, %22 : vector<16x128xf32>
    %cst_18 = arith.constant 0.000000e+00 : f32
    %24 = vector.broadcast %cst_18 : f32 to vector<16x128xf32>
    %25 = arith.maximumf %23, %24 : vector<16x128xf32>
    %26 = arith.truncf %25 : vector<16x128xf32> to vector<16x128xbf16>
    %c0_19 = arith.constant 0 : index
    %c0_20 = arith.constant 0 : index
    %27 = vector.load %arg8[%c0_19, %c0_20] : memref<128x128xbf16, #tpu.memory_space<vmem>>, vector<128x128xbf16>
    %cst_21 = arith.constant dense<0.000000e+00> : vector<16x128xf32>
    %28 = tpu.matmul %26, %27, %cst_21 {dimension_numbers = #tpu.dot_dimension_numbers<[1], [0], [0], [1], [0, 0, 1, 1], [], []>} : vector<16x128xbf16>, vector<128x128xbf16>, vector<16x128xf32> -> vector<16x128xf32>
    %c0_22 = arith.constant 0 : index
    %c0_23 = arith.constant 0 : index
    %29 = vector.load %arg9[%c0_22, %c0_23] : memref<1x128xf32, #tpu.memory_space<vmem>>, vector<1x128xf32>
    %30 = vector.broadcast %29 : vector<1x128xf32> to vector<16x128xf32>
    %31 = arith.addf %28, %30 : vector<16x128xf32>
    %cst_24 = arith.constant 0.000000e+00 : f32
    %32 = vector.broadcast %cst_24 : f32 to vector<16x128xf32>
    %33 = arith.maximumf %31, %32 : vector<16x128xf32>
    %34 = arith.truncf %33 : vector<16x128xf32> to vector<16x128xbf16>
    %c0_25 = arith.constant 0 : index
    %c0_26 = arith.constant 0 : index
    %35 = vector.load %arg10[%c0_25, %c0_26] : memref<128x128xbf16, #tpu.memory_space<vmem>>, vector<128x128xbf16>
    %cst_27 = arith.constant dense<0.000000e+00> : vector<16x128xf32>
    %36 = tpu.matmul %34, %35, %cst_27 {dimension_numbers = #tpu.dot_dimension_numbers<[1], [0], [0], [1], [0, 0, 1, 1], [], []>} : vector<16x128xbf16>, vector<128x128xbf16>, vector<16x128xf32> -> vector<16x128xf32>
    %c0_28 = arith.constant 0 : index
    %c0_29 = arith.constant 0 : index
    %37 = vector.load %arg11[%c0_28, %c0_29] : memref<1x128xf32, #tpu.memory_space<vmem>>, vector<1x128xf32>
    %38 = vector.broadcast %37 : vector<1x128xf32> to vector<16x128xf32>
    %39 = arith.addf %36, %38 : vector<16x128xf32>
    %40 = vector.extract_strided_slice %39 {offsets = [0, 0], sizes = [16, 9], strides = [1, 1]} : vector<16x128xf32> to vector<16x9xf32>
    %c0_30 = arith.constant 0 : index
    %c0_31 = arith.constant 0 : index
    %41 = vector.load %arg12[%c0_30, %c0_31] : memref<16x9xf32, #tpu.memory_space<vmem>>, vector<16x9xf32>
    tpu.vector_store %arg12[%c0_30, %c0_31], %40 {strides = array<i32>} : memref<16x9xf32, #tpu.memory_space<vmem>>, vector<16x9xf32>,
    return
  }
  func.func @transform_0(%arg0: i32) -> (i32, i32) {
    %c0_i32 = arith.constant 0 : i32
    %c0_i32_0 = arith.constant 0 : i32
    return %arg0, %c0_i32 : i32, i32
  }
  func.func @transform_1(%arg0: i32) -> (i32, i32) {
    %c0_i32 = arith.constant 0 : i32
    %c0_i32_0 = arith.constant 0 : i32
    %c0_i32_1 = arith.constant 0 : i32
    return %c0_i32, %c0_i32_0 : i32, i32
  }
  func.func @transform_2(%arg0: i32) -> (i32, i32) {
    %c0_i32 = arith.constant 0 : i32
    %c0_i32_0 = arith.constant 0 : i32
    %c0_i32_1 = arith.constant 0 : i32
    return %c0_i32, %c0_i32_0 : i32, i32
  }
  func.func @transform_3(%arg0: i32) -> (i32, i32) {
    %c0_i32 = arith.constant 0 : i32
    %c0_i32_0 = arith.constant 0 : i32
    %c0_i32_1 = arith.constant 0 : i32
    return %c0_i32, %c0_i32_0 : i32, i32
  }
  func.func @transform_4(%arg0: i32) -> (i32, i32) {
    %c0_i32 = arith.constant 0 : i32
    %c0_i32_0 = arith.constant 0 : i32
    %c0_i32_1 = arith.constant 0 : i32
    return %c0_i32, %c0_i32_0 : i32, i32
  }
  func.func @transform_5(%arg0: i32) -> (i32, i32) {
    %c0_i32 = arith.constant 0 : i32
    %c0_i32_0 = arith.constant 0 : i32
    %c0_i32_1 = arith.constant 0 : i32
    return %c0_i32, %c0_i32_0 : i32, i32
  }
  func.func @transform_6(%arg0: i32) -> (i32, i32) {
    %c0_i32 = arith.constant 0 : i32
    %c0_i32_0 = arith.constant 0 : i32
    %c0_i32_1 = arith.constant 0 : i32
    return %c0_i32, %c0_i32_0 : i32, i32
  }
  func.func @transform_7(%arg0: i32) -> (i32, i32) {
    %c0_i32 = arith.constant 0 : i32
    %c0_i32_0 = arith.constant 0 : i32
    %c0_i32_1 = arith.constant 0 : i32
    return %c0_i32, %c0_i32_0 : i32, i32
  }
  func.func @transform_8(%arg0: i32) -> (i32, i32) {
    %c0_i32 = arith.constant 0 : i32
    %c0_i32_0 = arith.constant 0 : i32
    %c0_i32_1 = arith.constant 0 : i32
    return %c0_i32, %c0_i32_0 : i32, i32
  }
  func.func @transform_9(%arg0: i32) -> (i32, i32) {
    %c0_i32 = arith.constant 0 : i32
    %c0_i32_0 = arith.constant 0 : i32
    %c0_i32_1 = arith.constant 0 : i32
    return %c0_i32, %c0_i32_0 : i32, i32
  }
  func.func @transform_10(%arg0: i32) -> (i32, i32) {
    %c0_i32 = arith.constant 0 : i32
    %c0_i32_0 = arith.constant 0 : i32
    %c0_i32_1 = arith.constant 0 : i32
    return %c0_i32, %c0_i32_0 : i32, i32
  }
  func.func @transform_11(%arg0: i32) -> (i32, i32) {
    %c0_i32 = arith.constant 0 : i32
    %c0_i32_0 = arith.constant 0 : i32
    return %arg0, %c0_i32 : i32, i32
  }
}

</mosaic_0001>

<llo_original>
// kernel: tpu_custom_call.1
$region0: #{tpu_custom_call.1}
  #allocation0 [shape = 'u32[]', space=smem, size = 0x4, offset = 0x4, fixed_abs, tag = 'smem constant byte address 0x4 - core index']
  #allocation1 [shape = 'u32[144,128]{1,0:T(1,128)}', space=vmem, size = 0x12000, scoped, tag = 'internal scratch']
  %s0 = inlined_call_operand.hbm [shape: bf16[16,10], index: 0, kind: input, shape index: {}]
  %s1 = inlined_call_operand.hbm [shape: bf16[128,256], index: 1, kind: input, shape index: {}]
  %s2 = inlined_call_operand.vmem [shape: f32[1,256], index: 2, kind: input, shape index: {}]
  %s3 = inlined_call_operand.hbm [shape: bf16[256,256], index: 3, kind: input, shape index: {}]
  %s4 = inlined_call_operand.vmem [shape: f32[1,256], index: 4, kind: input, shape index: {}]
  %s5 = inlined_call_operand.hbm [shape: bf16[256,128], index: 5, kind: input, shape index: {}]
  %s6 = inlined_call_operand.vmem [shape: f32[1,128], index: 6, kind: input, shape index: {}]
  %s7 = inlined_call_operand.hbm [shape: bf16[128,128], index: 7, kind: input, shape index: {}]
  %s8 = inlined_call_operand.vmem [shape: f32[1,128], index: 8, kind: input, shape index: {}]
  %s9 = inlined_call_operand.hbm [shape: bf16[128,128], index: 9, kind: input, shape index: {}]
  %s10 = inlined_call_operand.vmem [shape: f32[1,128], index: 10, kind: input, shape index: {}]
  %s11 = inlined_call_operand.hbm [shape: f32[16,9], index: 11, kind: output, shape index: {}]
  %s12 = sld [smem:[#allocation0]]
  $region78: #{tpu_custom_call.1} parent=0
    _
  %s14 = ssub.s32 1, %s12
  %s15 = scalar_select 0, %s14, %s12
  $region1: #{tpu_custom_call.1} parent=0
    #allocation2 [shape = 'u8[4096]{0}', space=vmem, size = 0x1000, scoped, tag = 'input window, operand 0, single buffered']
    #allocation3 [shape = 's32[1]{0}', space=sflag, size = 0x4, scoped, tag = 'scoped memory for tpu_custom_call.1']
    #allocation4 [shape = 's32[1]{0}', space=sflag, size = 0x4, scoped, tag = 'scoped memory for tpu_custom_call.1']
    #allocation5 [shape = 'u8[65536]{0}', space=vmem, size = 0x10000, scoped, tag = 'input window, operand 1, single buffered']
    #allocation6 [shape = 's32[1]{0}', space=sflag, size = 0x4, scoped, tag = 'scoped memory for tpu_custom_call.1']
    #allocation7 [shape = 'u8[131072]{0}', space=vmem, size = 0x20000, scoped, tag = 'input window, operand 3, single buffered']
    #allocation8 [shape = 'u8[65536]{0}', space=vmem, size = 0x10000, scoped, tag = 'input window, operand 5, single buffered']
    #allocation9 [shape = 's32[1]{0}', space=sflag, size = 0x4, scoped, tag = 'scoped memory for tpu_custom_call.1']
    #allocation10 [shape = 'u8[32768]{0}', space=vmem, size = 0x8000, scoped, tag = 'input window, operand 7, single buffered']
    #allocation11 [shape = 'u8[32768]{0}', space=vmem, size = 0x8000, scoped, tag = 'input window, operand 9, single buffered']
    #allocation12 [shape = 's32[1]{0}', space=sflag, size = 0x4, scoped, tag = 'scoped memory for tpu_custom_call.1']
    #allocation13 [shape = 'u8[8192]{0}', space=vmem, size = 0x2000, scoped, tag = 'output window, operand 0, single buffered']
    %16 = vsyncpa [#allocation3], 0
    %17 = vsyncpa [#allocation6], 0
    %18 = vsyncpa [#allocation9], 0
    %19 = vsyncpa [#allocation12], 0
    %20 = vsyncpa [#allocation4], 0
    // Predicated region
    $region2: #{tpu_custom_call.1} parent=1 // pred_check
      _
    $region3: #{tpu_custom_call.1} parent=1 // pred_check_branch
      %22 = sbr.rel (0) target = $region5
    $region4: #{tpu_custom_call.1} parent=1 // pred_region
      %s24 = ssub.s32 128, 128
      %25 = vsyncadd [#allocation3], %s24
      %s26 = sshll.u32 [#allocation2], 4
      %s27 = int_to_ptr.vmem [resolvable:$true] %s26
      %32 = dma.hbm_to_vmem [thread:$0]  %s0, 128, %s27, [#allocation3], 64, 64, 4
    $region5: #{tpu_custom_call.1} parent=1 // pred_fallthru
      _
    // Predicated region
    $region6: #{tpu_custom_call.1} parent=1 // pred_check
      _
    $region7: #{tpu_custom_call.1} parent=1 // pred_check_branch
      %34 = sbr.rel (0) target = $region9
    $region8: #{tpu_custom_call.1} parent=1 // pred_region
      %s36 = ssub.s32 2048, 2048
      %37 = vsyncadd [#allocation6], %s36
      %s38 = sshll.u32 [#allocation5], 4
      %s39 = int_to_ptr.vmem [resolvable:$true] %s38
      %44 = dma.hbm_to_vmem [thread:$0]  %s1, 2048, %s39, [#allocation6], 128, 128, 8
    $region9: #{tpu_custom_call.1} parent=1 // pred_fallthru
      _
    // Predicated region
    $region10: #{tpu_custom_call.1} parent=1 // pred_check
      _
    $region11: #{tpu_custom_call.1} parent=1 // pred_check_branch
      %46 = sbr.rel (0) target = $region13
    $region12: #{tpu_custom_call.1} parent=1 // pred_region
      _
    $region13: #{tpu_custom_call.1} parent=1 // pred_fallthru
      _
    // Predicated region
    $region14: #{tpu_custom_call.1} parent=1 // pred_check
      _
    $region15: #{tpu_custom_call.1} parent=1 // pred_check_branch
      %48 = sbr.rel (0) target = $region17
    $region16: #{tpu_custom_call.1} parent=1 // pred_region
      %s50 = ssub.s32 4096, 4096
      %51 = vsyncadd [#allocation6], %s50
      %s52 = sshll.u32 [#allocation7], 4
      %s53 = int_to_ptr.vmem [resolvable:$true] %s52
      %58 = dma.hbm_to_vmem [thread:$0]  %s3, 4096, %s53, [#allocation6], 128, 128, 8
    $region17: #{tpu_custom_call.1} parent=1 // pred_fallthru
      _
    // Predicated region
    $region18: #{tpu_custom_call.1} parent=1 // pred_check
      _
    $region19: #{tpu_custom_call.1} parent=1 // pred_check_branch
      %60 = sbr.rel (0) target = $region21
    $region20: #{tpu_custom_call.1} parent=1 // pred_region
      _
    $region21: #{tpu_custom_call.1} parent=1 // pred_fallthru
      _
    // Predicated region
    $region22: #{tpu_custom_call.1} parent=1 // pred_check
      _
    $region23: #{tpu_custom_call.1} parent=1 // pred_check_branch
      %62 = sbr.rel (0) target = $region25
    $region24: #{tpu_custom_call.1} parent=1 // pred_region
      %s64 = ssub.s32 2048, 2048
      %65 = vsyncadd [#allocation9], %s64
      %s66 = sshll.u32 [#allocation8], 4
      %s67 = int_to_ptr.vmem [resolvable:$true] %s66
      %72 = dma.hbm_to_vmem [thread:$0]  %s5, 2048, %s67, [#allocation9], 64, 64, 4
    $region25: #{tpu_custom_call.1} parent=1 // pred_fallthru
      _
    // Predicated region
    $region26: #{tpu_custom_call.1} parent=1 // pred_check
      _
    $region27: #{tpu_custom_call.1} parent=1 // pred_check_branch
      %74 = sbr.rel (0) target = $region29
    $region28: #{tpu_custom_call.1} parent=1 // pred_region
      _
    $region29: #{tpu_custom_call.1} parent=1 // pred_fallthru
      _
    // Predicated region
    $region30: #{tpu_custom_call.1} parent=1 // pred_check
      _
    $region31: #{tpu_custom_call.1} parent=1 // pred_check_branch
      %76 = sbr.rel (0) target = $region33
    $region32: #{tpu_custom_call.1} parent=1 // pred_region
      %s78 = ssub.s32 1024, 1024
      %79 = vsyncadd [#allocation9], %s78
      %s80 = sshll.u32 [#allocation10], 4
      %s81 = int_to_ptr.vmem [resolvable:$true] %s80
      %86 = dma.hbm_to_vmem [thread:$0]  %s7, 1024, %s81, [#allocation9], 64, 64, 4
    $region33: #{tpu_custom_call.1} parent=1 // pred_fallthru
      _
    // Predicated region
    $region34: #{tpu_custom_call.1} parent=1 // pred_check
      _
    $region35: #{tpu_custom_call.1} parent=1 // pred_check_branch
      %88 = sbr.rel (0) target = $region37
    $region36: #{tpu_custom_call.1} parent=1 // pred_region
      _
    $region37: #{tpu_custom_call.1} parent=1 // pred_fallthru
      _
    // Predicated region
    $region38: #{tpu_custom_call.1} parent=1 // pred_check
      _
    $region39: #{tpu_custom_call.1} parent=1 // pred_check_branch
      %90 = sbr.rel (0) target = $region41
    $region40: #{tpu_custom_call.1} parent=1 // pred_region
      %s92 = ssub.s32 1024, 1024
      %93 = vsyncadd [#allocation12], %s92
      %s94 = sshll.u32 [#allocation11], 4
      %s95 = int_to_ptr.vmem [resolvable:$true] %s94
      %100 = dma.hbm_to_vmem [thread:$0]  %s9, 1024, %s95, [#allocation12], 64, 64, 4
    $region41: #{tpu_custom_call.1} parent=1 // pred_fallthru
      _
    // Predicated region
    $region42: #{tpu_custom_call.1} parent=1 // pred_check
      _
    $region43: #{tpu_custom_call.1} parent=1 // pred_check_branch
      %102 = sbr.rel (0) target = $region45
    $region44: #{tpu_custom_call.1} parent=1 // pred_region
      _
    $region45: #{tpu_custom_call.1} parent=1 // pred_fallthru
      _
    // Predicated region
    $region46: #{tpu_custom_call.1} parent=1 // pred_check
      _
    $region47: #{tpu_custom_call.1} parent=1 // pred_check_branch
      %104 = sbr.rel (0) target = $region49
    $region48: #{tpu_custom_call.1} parent=1 // pred_region
      %105 = dma.done [#allocation3], 128
    $region49: #{tpu_custom_call.1} parent=1 // pred_fallthru
      _
    // Predicated region
    $region50: #{tpu_custom_call.1} parent=1 // pred_check
      _
    $region51: #{tpu_custom_call.1} parent=1 // pred_check_branch
      %107 = sbr.rel (0) target = $region53
    $region52: #{tpu_custom_call.1} parent=1 // pred_region
      %108 = dma.done [#allocation6], 2048
    $region53: #{tpu_custom_call.1} parent=1 // pred_fallthru
      _
    // Predicated region
    $region54: #{tpu_custom_call.1} parent=1 // pred_check
      _
    $region55: #{tpu_custom_call.1} parent=1 // pred_check_branch
      %110 = sbr.rel (0) target = $region57
    $region56: #{tpu_custom_call.1} parent=1 // pred_region
      %111 = dma.done [#allocation6], 4096
    $region57: #{tpu_custom_call.1} parent=1 // pred_fallthru
      _
    // Predicated region
    $region58: #{tpu_custom_call.1} parent=1 // pred_check
      _
    $region59: #{tpu_custom_call.1} parent=1 // pred_check_branch
      %113 = sbr.rel (0) target = $region61
    $region60: #{tpu_custom_call.1} parent=1 // pred_region
      %114 = dma.done [#allocation9], 2048
    $region61: #{tpu_custom_call.1} parent=1 // pred_fallthru
      _
    // Predicated region
    $region62: #{tpu_custom_call.1} parent=1 // pred_check
      _
    $region63: #{tpu_custom_call.1} parent=1 // pred_check_branch
      %116 = sbr.rel (0) target = $region65
    $region64: #{tpu_custom_call.1} parent=1 // pred_region
      %117 = dma.done [#allocation9], 1024
    $region65: #{tpu_custom_call.1} parent=1 // pred_fallthru
      _
    // Predicated region
    $region66: #{tpu_custom_call.1} parent=1 // pred_check
      _
    $region67: #{tpu_custom_call.1} parent=1 // pred_check_branch
      %119 = sbr.rel (0) target = $region69
    $region68: #{tpu_custom_call.1} parent=1 // pred_region
      %120 = dma.done [#allocation12], 1024
    $region69: #{tpu_custom_call.1} parent=1 // pred_fallthru
      _
    %v122 = vld [vmem:[#allocation2] sm:$0xf]
    %v123 = vld [vmem:[#allocation2 + $0x4] sm:$0xf]
    %v126 = vunpack.c.l.b16 %v122
    %v127 = vunpack.c.l.b16 %v123
    %v128 = vpack.c.b16 %v127, %v126
    %vm129 = vcmask 80896
    %v132 = vsel %vm129, %v128, 0
    %v134 = vld [vmem:[#allocation5] sm:$0xff]
    %v135 = vld [vmem:[#allocation5 + $0x8] sm:$0xff]
    %v136 = vld [vmem:[#allocation5 + $0x10] sm:$0xff]
    %v137 = vld [vmem:[#allocation5 + $0x18] sm:$0xff]
    %v138 = vld [vmem:[#allocation5 + $0x20] sm:$0xff]
    %v139 = vld [vmem:[#allocation5 + $0x28] sm:$0xff]
    %v140 = vld [vmem:[#allocation5 + $0x30] sm:$0xff]
    %v141 = vld [vmem:[#allocation5 + $0x38] sm:$0xff]
    %v142 = vld [vmem:[#allocation5 + $0x40] sm:$0xff]
    %v143 = vld [vmem:[#allocation5 + $0x48] sm:$0xff]
    %v144 = vld [vmem:[#allocation5 + $0x50] sm:$0xff]
    %v145 = vld [vmem:[#allocation5 + $0x58] sm:$0xff]
    %v146 = vld [vmem:[#allocation5 + $0x60] sm:$0xff]
    %v147 = vld [vmem:[#allocation5 + $0x68] sm:$0xff]
    %v148 = vld [vmem:[#allocation5 + $0x70] sm:$0xff]
    %v149 = vld [vmem:[#allocation5 + $0x78] sm:$0xff]
    %v150 = vld [vmem:[%s2] sm:$0x3]
    %v152 = vlaneseq
    %v153 = vshrl.u32 %v152, 7
    %v154 = vsub.s32 0, %v153
    %v155 = vrot.slane %v150, %v154
    %v156 = vlaneseq
    %v157 = vshrl.u32 %v156, 7
    %v158 = vsub.s32 1, %v157
    %v159 = vrot.slane %v150, %v158
    %v178 = vunpack.c.l.b16 %v134
    %v179 = vunpack.c.h.b16 %v134
    %v180 = vunpack.c.l.b16 %v135
    %v181 = vunpack.c.h.b16 %v135
    %v182 = vunpack.c.l.b16 %v136
    %v183 = vunpack.c.h.b16 %v136
    %v184 = vunpack.c.l.b16 %v137
    %v185 = vunpack.c.h.b16 %v137
    %v186 = vunpack.c.l.b16 %v138
    %v187 = vunpack.c.h.b16 %v138
    %v188 = vunpack.c.l.b16 %v139
    %v189 = vunpack.c.h.b16 %v139
    %v190 = vunpack.c.l.b16 %v140
    %v191 = vunpack.c.h.b16 %v140
    %v192 = vunpack.c.l.b16 %v141
    %v193 = vunpack.c.h.b16 %v141
    %v194 = vunpack.c.l.b16 %v142
    %v195 = vunpack.c.h.b16 %v142
    %v196 = vunpack.c.l.b16 %v143
    %v197 = vunpack.c.h.b16 %v143
    %v198 = vunpack.c.l.b16 %v144
    %v199 = vunpack.c.h.b16 %v144
    %v200 = vunpack.c.l.b16 %v145
    %v201 = vunpack.c.h.b16 %v145
    %v202 = vunpack.c.l.b16 %v146
    %v203 = vunpack.c.h.b16 %v146
    %v204 = vunpack.c.l.b16 %v147
    %v205 = vunpack.c.h.b16 %v147
    %v206 = vunpack.c.l.b16 %v148
    %v207 = vunpack.c.h.b16 %v148
    %v208 = vunpack.c.l.b16 %v149
    %v209 = vunpack.c.h.b16 %v149
    %v210 = vpack.c.b16 %v180, %v178
    %v211 = vpack.c.b16 %v181, %v179
    %v212 = vpack.c.b16 %v184, %v182
    %v213 = vpack.c.b16 %v185, %v183
    %v214 = vpack.c.b16 %v188, %v186
    %v215 = vpack.c.b16 %v189, %v187
    %v216 = vpack.c.b16 %v192, %v190
    %v217 = vpack.c.b16 %v193, %v191
    %v218 = vpack.c.b16 %v196, %v194
    %v219 = vpack.c.b16 %v197, %v195
    %v220 = vpack.c.b16 %v200, %v198
    %v221 = vpack.c.b16 %v201, %v199
    %v222 = vpack.c.b16 %v204, %v202
    %v223 = vpack.c.b16 %v205, %v203
    %v224 = vpack.c.b16 %v208, %v206
    %v225 = vpack.c.b16 %v209, %v207
    %242 = vmatprep.subr.bf16.mxu0 %v211
    %243 = vmatpush1.bf16.msra.mxu0 %v210
    %244 = vmatprep.subr.bf16.mxu0 %v213
    %245 = vmatpush1.bf16.msra.mxu0 %v212
    %246 = vmatprep.subr.bf16.mxu0 %v215
    %247 = vmatpush1.bf16.msra.mxu0 %v214
    %248 = vmatprep.subr.bf16.mxu0 %v217
    %249 = vmatpush1.bf16.msra.mxu0 %v216
    %250 = vmatprep.subr.bf16.mxu0 %v219
    %251 = vmatpush1.bf16.msra.mxu0 %v218
    %252 = vmatprep.subr.bf16.mxu0 %v221
    %253 = vmatpush1.bf16.msra.mxu0 %v220
    %254 = vmatprep.subr.bf16.mxu0 %v223
    %255 = vmatpush1.bf16.msra.mxu0 %v222
    %256 = vmatprep.subr.bf16.mxu0 %v225
    %257 = vmatpush1.bf16.msra.mxu0 %v224
    %258 = vmatprep.subr.bf16.mxu0 0
    %259 = vmatpush1.bf16.msra.mxu0 0
    %260 = vmatprep.subr.bf16.mxu0 0
    %261 = vmatpush1.bf16.msra.mxu0 0
    %262 = vmatprep.subr.bf16.mxu0 0
    %263 = vmatpush1.bf16.msra.mxu0 0
    %264 = vmatprep.subr.bf16.mxu0 0
    %265 = vmatpush1.bf16.msra.mxu0 0
    %266 = vmatprep.subr.bf16.mxu0 0
    %267 = vmatpush1.bf16.msra.mxu0 0
    %268 = vmatprep.subr.bf16.mxu0 0
    %269 = vmatpush1.bf16.msra.mxu0 0
    %270 = vmatprep.subr.bf16.mxu0 0
    %271 = vmatpush1.bf16.msra.mxu0 0
    %272 = vmatprep.subr.bf16.mxu0 0
    %273 = vmatpush1.bf16.msra.mxu0 0
    %274 = vmatprep.mubr.bf16.mxu0 0
    %275 = vmatmul.mubr.bf16.gmra.mrb[0].mxu0 %v132
    %v276 = vpop.f32.mrb[0].mxu0
    %v277 = vadd.f32 %v155, %v276
    %v278 = vpop.f32.mrb[0].mxu0
    %v279 = vadd.f32 %v159, %v278
    %v280 = vpop.f32.mrb[0].mxu0
    %v281 = vadd.f32 %v155, %v280
    %v282 = vpop.f32.mrb[0].mxu0
    %v283 = vadd.f32 %v159, %v282
    %284 = vdwg.mxu0
    %v285 = vmax.f32 %v277, 0.0
    %v286 = vmax.f32 %v279, 0.0
    %v287 = vmax.f32 %v281, 0.0
    %v288 = vmax.f32 %v283, 0.0
    %v289 = vpack.c.bf16 %v287, %v285
    %v290 = vpack.c.bf16 %v288, %v286
    %v291 = vld [vmem:[#allocation7] sm:$0xff]
    %v292 = vld [vmem:[#allocation7 + $0x8] sm:$0xff]
    %v293 = vld [vmem:[#allocation7 + $0x10] sm:$0xff]
    %v294 = vld [vmem:[#allocation7 + $0x18] sm:$0xff]
    %v295 = vld [vmem:[#allocation7 + $0x20] sm:$0xff]
    %v296 = vld [vmem:[#allocation7 + $0x28] sm:$0xff]
    %v297 = vld [vmem:[#allocation7 + $0x30] sm:$0xff]
    %v298 = vld [vmem:[#allocation7 + $0x38] sm:$0xff]
    %v299 = vld [vmem:[#allocation7 + $0x40] sm:$0xff]
    %v300 = vld [vmem:[#allocation7 + $0x48] sm:$0xff]
    %v301 = vld [vmem:[#allocation7 + $0x50] sm:$0xff]
    %v302 = vld [vmem:[#allocation7 + $0x58] sm:$0xff]
    %v303 = vld [vmem:[#allocation7 + $0x60] sm:$0xff]
    %v304 = vld [vmem:[#allocation7 + $0x68] sm:$0xff]
    %v305 = vld [vmem:[#allocation7 + $0x70] sm:$0xff]
    %v306 = vld [vmem:[#allocation7 + $0x78] sm:$0xff]
    %v307 = vld [vmem:[#allocation7 + $0x80] sm:$0xff]
    %v308 = vld [vmem:[#allocation7 + $0x88] sm:$0xff]
    %v309 = vld [vmem:[#allocation7 + $0x90] sm:$0xff]
    %v310 = vld [vmem:[#allocation7 + $0x98] sm:$0xff]
    %v311 = vld [vmem:[#allocation7 + $0xa0] sm:$0xff]
    %v312 = vld [vmem:[#allocation7 + $0xa8] sm:$0xff]
    %v313 = vld [vmem:[#allocation7 + $0xb0] sm:$0xff]
    %v314 = vld [vmem:[#allocation7 + $0xb8] sm:$0xff]
    %v315 = vld [vmem:[#allocation7 + $0xc0] sm:$0xff]
    %v316 = vld [vmem:[#allocation7 + $0xc8] sm:$0xff]
    %v317 = vld [vmem:[#allocation7 + $0xd0] sm:$0xff]
    %v318 = vld [vmem:[#allocation7 + $0xd8] sm:$0xff]
    %v319 = vld [vmem:[#allocation7 + $0xe0] sm:$0xff]
    %v320 = vld [vmem:[#allocation7 + $0xe8] sm:$0xff]
    %v321 = vld [vmem:[#allocation7 + $0xf0] sm:$0xff]
    %v322 = vld [vmem:[#allocation7 + $0xf8] sm:$0xff]
    %v323 = vld [vmem:[%s4] sm:$0x3]
    %v325 = vlaneseq
    %v326 = vshrl.u32 %v325, 7
    %v327 = vsub.s32 0, %v326
    %v328 = vrot.slane %v323, %v327
    %v329 = vlaneseq
    %v330 = vshrl.u32 %v329, 7
    %v331 = vsub.s32 1, %v330
    %v332 = vrot.slane %v323, %v331
    %v367 = vunpack.c.l.b16 %v291
    %v368 = vunpack.c.h.b16 %v291
    %v369 = vunpack.c.l.b16 %v292
    %v370 = vunpack.c.h.b16 %v292
    %v371 = vunpack.c.l.b16 %v293
    %v372 = vunpack.c.h.b16 %v293
    %v373 = vunpack.c.l.b16 %v294
    %v374 = vunpack.c.h.b16 %v294
    %v375 = vunpack.c.l.b16 %v295
    %v376 = vunpack.c.h.b16 %v295
    %v377 = vunpack.c.l.b16 %v296
    %v378 = vunpack.c.h.b16 %v296
    %v379 = vunpack.c.l.b16 %v297
    %v380 = vunpack.c.h.b16 %v297
    %v381 = vunpack.c.l.b16 %v298
    %v382 = vunpack.c.h.b16 %v298
    %v383 = vunpack.c.l.b16 %v299
    %v384 = vunpack.c.h.b16 %v299
    %v385 = vunpack.c.l.b16 %v300
    %v386 = vunpack.c.h.b16 %v300
    %v387 = vunpack.c.l.b16 %v301
    %v388 = vunpack.c.h.b16 %v301
    %v389 = vunpack.c.l.b16 %v302
    %v390 = vunpack.c.h.b16 %v302
    %v391 = vunpack.c.l.b16 %v303
    %v392 = vunpack.c.h.b16 %v303
    %v393 = vunpack.c.l.b16 %v304
    %v394 = vunpack.c.h.b16 %v304
    %v395 = vunpack.c.l.b16 %v305
    %v396 = vunpack.c.h.b16 %v305
    %v397 = vunpack.c.l.b16 %v306
    %v398 = vunpack.c.h.b16 %v306
    %v399 = vunpack.c.l.b16 %v307
    %v400 = vunpack.c.h.b16 %v307
    %v401 = vunpack.c.l.b16 %v308
    %v402 = vunpack.c.h.b16 %v308
    %v403 = vunpack.c.l.b16 %v309
    %v404 = vunpack.c.h.b16 %v309
    %v405 = vunpack.c.l.b16 %v310
    %v406 = vunpack.c.h.b16 %v310
    %v407 = vunpack.c.l.b16 %v311
    %v408 = vunpack.c.h.b16 %v311
    %v409 = vunpack.c.l.b16 %v312
    %v410 = vunpack.c.h.b16 %v312
    %v411 = vunpack.c.l.b16 %v313
    %v412 = vunpack.c.h.b16 %v313
    %v413 = vunpack.c.l.b16 %v314
    %v414 = vunpack.c.h.b16 %v314
    %v415 = vunpack.c.l.b16 %v315
    %v416 = vunpack.c.h.b16 %v315
    %v417 = vunpack.c.l.b16 %v316
    %v418 = vunpack.c.h.b16 %v316
    %v419 = vunpack.c.l.b16 %v317
    %v420 = vunpack.c.h.b16 %v317
    %v421 = vunpack.c.l.b16 %v318
    %v422 = vunpack.c.h.b16 %v318
    %v423 = vunpack.c.l.b16 %v319
    %v424 = vunpack.c.h.b16 %v319
    %v425 = vunpack.c.l.b16 %v320
    %v426 = vunpack.c.h.b16 %v320
    %v427 = vunpack.c.l.b16 %v321
    %v428 = vunpack.c.h.b16 %v321
    %v429 = vunpack.c.l.b16 %v322
    %v430 = vunpack.c.h.b16 %v322
    %v431 = vpack.c.b16 %v369, %v367
    %v432 = vpack.c.b16 %v370, %v368
    %v433 = vpack.c.b16 %v373, %v371
    %v434 = vpack.c.b16 %v374, %v372
    %v435 = vpack.c.b16 %v377, %v375
    %v436 = vpack.c.b16 %v378, %v376
    %v437 = vpack.c.b16 %v381, %v379
    %v438 = vpack.c.b16 %v382, %v380
    %v439 = vpack.c.b16 %v385, %v383
    %v440 = vpack.c.b16 %v386, %v384
    %v441 = vpack.c.b16 %v389, %v387
    %v442 = vpack.c.b16 %v390, %v388
    %v443 = vpack.c.b16 %v393, %v391
    %v444 = vpack.c.b16 %v394, %v392
    %v445 = vpack.c.b16 %v397, %v395
    %v446 = vpack.c.b16 %v398, %v396
    %v447 = vpack.c.b16 %v401, %v399
    %v448 = vpack.c.b16 %v402, %v400
    %v449 = vpack.c.b16 %v405, %v403
    %v450 = vpack.c.b16 %v406, %v404
    %v451 = vpack.c.b16 %v409, %v407
    %v452 = vpack.c.b16 %v410, %v408
    %v453 = vpack.c.b16 %v413, %v411
    %v454 = vpack.c.b16 %v414, %v412
    %v455 = vpack.c.b16 %v417, %v415
    %v456 = vpack.c.b16 %v418, %v416
    %v457 = vpack.c.b16 %v421, %v419
    %v458 = vpack.c.b16 %v422, %v420
    %v459 = vpack.c.b16 %v425, %v423
    %v460 = vpack.c.b16 %v426, %v424
    %v461 = vpack.c.b16 %v429, %v427
    %v462 = vpack.c.b16 %v430, %v428
    %495 = vmatprep.subr.bf16.mxu0 %v432
    %496 = vmatpush1.bf16.msra.mxu0 %v431
    %497 = vmatprep.subr.bf16.mxu0 %v434
    %498 = vmatpush1.bf16.msra.mxu0 %v433
    %499 = vmatprep.subr.bf16.mxu0 %v436
    %500 = vmatpush1.bf16.msra.mxu0 %v435
    %501 = vmatprep.subr.bf16.mxu0 %v438
    %502 = vmatpush1.bf16.msra.mxu0 %v437
    %503 = vmatprep.subr.bf16.mxu0 %v440
    %504 = vmatpush1.bf16.msra.mxu0 %v439
    %505 = vmatprep.subr.bf16.mxu0 %v442
    %506 = vmatpush1.bf16.msra.mxu0 %v441
    %507 = vmatprep.subr.bf16.mxu0 %v444
    %508 = vmatpush1.bf16.msra.mxu0 %v443
    %509 = vmatprep.subr.bf16.mxu0 %v446
    %510 = vmatpush1.bf16.msra.mxu0 %v445
    %511 = vmatprep.subr.bf16.mxu0 %v448
    %512 = vmatpush1.bf16.msra.mxu0 %v447
    %513 = vmatprep.subr.bf16.mxu0 %v450
    %514 = vmatpush1.bf16.msra.mxu0 %v449
    %515 = vmatprep.subr.bf16.mxu0 %v452
    %516 = vmatpush1.bf16.msra.mxu0 %v451
    %517 = vmatprep.subr.bf16.mxu0 %v454
    %518 = vmatpush1.bf16.msra.mxu0 %v453
    %519 = vmatprep.subr.bf16.mxu0 %v456
    %520 = vmatpush1.bf16.msra.mxu0 %v455
    %521 = vmatprep.subr.bf16.mxu0 %v458
    %522 = vmatpush1.bf16.msra.mxu0 %v457
    %523 = vmatprep.subr.bf16.mxu0 %v460
    %524 = vmatpush1.bf16.msra.mxu0 %v459
    %525 = vmatprep.subr.bf16.mxu0 %v462
    %526 = vmatpush1.bf16.msra.mxu0 %v461
    %527 = vmatprep.mubr.bf16.mxu0 %v290
    %528 = vmatmul.mubr.bf16.gmra.mrb[0].mxu0 %v289
    %v529 = vpop.f32.mrb[0].mxu0
    %v530 = vadd.f32 %v328, %v529
    %v531 = vpop.f32.mrb[0].mxu0
    %v532 = vadd.f32 %v332, %v531
    %v533 = vpop.f32.mrb[0].mxu0
    %v534 = vadd.f32 %v328, %v533
    %v535 = vpop.f32.mrb[0].mxu0
    %v536 = vadd.f32 %v332, %v535
    %537 = vdwg.mxu0
    %v538 = vmax.f32 %v530, 0.0
    %v539 = vmax.f32 %v532, 0.0
    %v540 = vmax.f32 %v534, 0.0
    %v541 = vmax.f32 %v536, 0.0
    %v542 = vpack.c.bf16 %v540, %v538
    %v543 = vpack.c.bf16 %v541, %v539
    %v544 = vld [vmem:[#allocation8] sm:$0xf]
    %v545 = vld [vmem:[#allocation8 + $0x4] sm:$0xf]
    %v546 = vld [vmem:[#allocation8 + $0x8] sm:$0xf]
    %v547 = vld [vmem:[#allocation8 + $0xc] sm:$0xf]
    %v548 = vld [vmem:[#allocation8 + $0x10] sm:$0xf]
    %v549 = vld [vmem:[#allocation8 + $0x14] sm:$0xf]
    %v550 = vld [vmem:[#allocation8 + $0x18] sm:$0xf]
    %v551 = vld [vmem:[#allocation8 + $0x1c] sm:$0xf]
    %v552 = vld [vmem:[#allocation8 + $0x20] sm:$0xf]
    %v553 = vld [vmem:[#allocation8 + $0x24] sm:$0xf]
    %v554 = vld [vmem:[#allocation8 + $0x28] sm:$0xf]
    %v555 = vld [vmem:[#allocation8 + $0x2c] sm:$0xf]
    %v556 = vld [vmem:[#allocation8 + $0x30] sm:$0xf]
    %v557 = vld [vmem:[#allocation8 + $0x34] sm:$0xf]
    %v558 = vld [vmem:[#allocation8 + $0x38] sm:$0xf]
    %v559 = vld [vmem:[#allocation8 + $0x3c] sm:$0xf]
    %v560 = vld [vmem:[#allocation8 + $0x40] sm:$0xf]
    %v561 = vld [vmem:[#allocation8 + $0x44] sm:$0xf]
    %v562 = vld [vmem:[#allocation8 + $0x48] sm:$0xf]
    %v563 = vld [vmem:[#allocation8 + $0x4c] sm:$0xf]
    %v564 = vld [vmem:[#allocation8 + $0x50] sm:$0xf]
    %v565 = vld [vmem:[#allocation8 + $0x54] sm:$0xf]
    %v566 = vld [vmem:[#allocation8 + $0x58] sm:$0xf]
    %v567 = vld [vmem:[#allocation8 + $0x5c] sm:$0xf]
    %v568 = vld [vmem:[#allocation8 + $0x60] sm:$0xf]
    %v569 = vld [vmem:[#allocation8 + $0x64] sm:$0xf]
    %v570 = vld [vmem:[#allocation8 + $0x68] sm:$0xf]
    %v571 = vld [vmem:[#allocation8 + $0x6c] sm:$0xf]
    %v572 = vld [vmem:[#allocation8 + $0x70] sm:$0xf]
    %v573 = vld [vmem:[#allocation8 + $0x74] sm:$0xf]
    %v574 = vld [vmem:[#allocation8 + $0x78] sm:$0xf]
    %v575 = vld [vmem:[#allocation8 + $0x7c] sm:$0xf]
    %v576 = vld [vmem:[%s6] sm:$0x1]
    %v578 = vlaneseq
    %v579 = vshrl.u32 %v578, 7
    %v580 = vsub.s32 0, %v579
    %v581 = vrot.slane %v576, %v580
    %v615 = vunpack.c.l.b16 %v544
    %v616 = vunpack.c.l.b16 %v545
    %v617 = vunpack.c.l.b16 %v546
    %v618 = vunpack.c.l.b16 %v547
    %v619 = vunpack.c.l.b16 %v548
    %v620 = vunpack.c.l.b16 %v549
    %v621 = vunpack.c.l.b16 %v550
    %v622 = vunpack.c.l.b16 %v551
    %v623 = vunpack.c.l.b16 %v552
    %v624 = vunpack.c.l.b16 %v553
    %v625 = vunpack.c.l.b16 %v554
    %v626 = vunpack.c.l.b16 %v555
    %v627 = vunpack.c.l.b16 %v556
    %v628 = vunpack.c.l.b16 %v557
    %v629 = vunpack.c.l.b16 %v558
    %v630 = vunpack.c.l.b16 %v559
    %v631 = vunpack.c.l.b16 %v560
    %v632 = vunpack.c.l.b16 %v561
    %v633 = vunpack.c.l.b16 %v562
    %v634 = vunpack.c.l.b16 %v563
    %v635 = vunpack.c.l.b16 %v564
    %v636 = vunpack.c.l.b16 %v565
    %v637 = vunpack.c.l.b16 %v566
    %v638 = vunpack.c.l.b16 %v567
    %v639 = vunpack.c.l.b16 %v568
    %v640 = vunpack.c.l.b16 %v569
    %v641 = vunpack.c.l.b16 %v570
    %v642 = vunpack.c.l.b16 %v571
    %v643 = vunpack.c.l.b16 %v572
    %v644 = vunpack.c.l.b16 %v573
    %v645 = vunpack.c.l.b16 %v574
    %v646 = vunpack.c.l.b16 %v575
    %v647 = vpack.c.b16 %v616, %v615
    %v648 = vpack.c.b16 %v618, %v617
    %v649 = vpack.c.b16 %v620, %v619
    %v650 = vpack.c.b16 %v622, %v621
    %v651 = vpack.c.b16 %v624, %v623
    %v652 = vpack.c.b16 %v626, %v625
    %v653 = vpack.c.b16 %v628, %v627
    %v654 = vpack.c.b16 %v630, %v629
    %v655 = vpack.c.b16 %v632, %v631
    %v656 = vpack.c.b16 %v634, %v633
    %v657 = vpack.c.b16 %v636, %v635
    %v658 = vpack.c.b16 %v638, %v637
    %v659 = vpack.c.b16 %v640, %v639
    %v660 = vpack.c.b16 %v642, %v641
    %v661 = vpack.c.b16 %v644, %v643
    %v662 = vpack.c.b16 %v646, %v645
    %679 = vmatprep.subr.bf16.mxu0 0
    %680 = vmatpush1.bf16.msra.mxu0 %v647
    %681 = vmatprep.subr.bf16.mxu0 0
    %682 = vmatpush1.bf16.msra.mxu0 %v648
    %683 = vmatprep.subr.bf16.mxu0 0
    %684 = vmatpush1.bf16.msra.mxu0 %v649
    %685 = vmatprep.subr.bf16.mxu0 0
    %686 = vmatpush1.bf16.msra.mxu0 %v650
    %687 = vmatprep.subr.bf16.mxu0 0
    %688 = vmatpush1.bf16.msra.mxu0 %v651
    %689 = vmatprep.subr.bf16.mxu0 0
    %690 = vmatpush1.bf16.msra.mxu0 %v652
    %691 = vmatprep.subr.bf16.mxu0 0
    %692 = vmatpush1.bf16.msra.mxu0 %v653
    %693 = vmatprep.subr.bf16.mxu0 0
    %694 = vmatpush1.bf16.msra.mxu0 %v654
    %695 = vmatprep.subr.bf16.mxu0 0
    %696 = vmatpush1.bf16.msra.mxu0 %v655
    %697 = vmatprep.subr.bf16.mxu0 0
    %698 = vmatpush1.bf16.msra.mxu0 %v656
    %699 = vmatprep.subr.bf16.mxu0 0
    %700 = vmatpush1.bf16.msra.mxu0 %v657
    %701 = vmatprep.subr.bf16.mxu0 0
    %702 = vmatpush1.bf16.msra.mxu0 %v658
    %703 = vmatprep.subr.bf16.mxu0 0
    %704 = vmatpush1.bf16.msra.mxu0 %v659
    %705 = vmatprep.subr.bf16.mxu0 0
    %706 = vmatpush1.bf16.msra.mxu0 %v660
    %707 = vmatprep.subr.bf16.mxu0 0
    %708 = vmatpush1.bf16.msra.mxu0 %v661
    %709 = vmatprep.subr.bf16.mxu0 0
    %710 = vmatpush1.bf16.msra.mxu0 %v662
    %711 = vmatprep.mubr.bf16.mxu0 %v543
    %712 = vmatmul.mubr.bf16.gmra.mrb[0].mxu0 %v542
    %v713 = vpop.f32.mrb[0].mxu0
    %v714 = vadd.f32 %v581, %v713
    %v715 = vpop.f32.mrb[0].mxu0
    %v716 = vpop.f32.mrb[0].mxu0
    %v717 = vadd.f32 %v581, %v716
    %v718 = vpop.f32.mrb[0].mxu0
    %719 = vdwg.mxu0
    %v720 = vmax.f32 %v714, 0.0
    %v721 = vmax.f32 %v717, 0.0
    %v722 = vpack.c.bf16 %v721, %v720
    %v723 = vld [vmem:[#allocation10] sm:$0xf]
    %v724 = vld [vmem:[#allocation10 + $0x4] sm:$0xf]
    %v725 = vld [vmem:[#allocation10 + $0x8] sm:$0xf]
    %v726 = vld [vmem:[#allocation10 + $0xc] sm:$0xf]
    %v727 = vld [vmem:[#allocation10 + $0x10] sm:$0xf]
    %v728 = vld [vmem:[#allocation10 + $0x14] sm:$0xf]
    %v729 = vld [vmem:[#allocation10 + $0x18] sm:$0xf]
    %v730 = vld [vmem:[#allocation10 + $0x1c] sm:$0xf]
    %v731 = vld [vmem:[#allocation10 + $0x20] sm:$0xf]
    %v732 = vld [vmem:[#allocation10 + $0x24] sm:$0xf]
    %v733 = vld [vmem:[#allocation10 + $0x28] sm:$0xf]
    %v734 = vld [vmem:[#allocation10 + $0x2c] sm:$0xf]
    %v735 = vld [vmem:[#allocation10 + $0x30] sm:$0xf]
    %v736 = vld [vmem:[#allocation10 + $0x34] sm:$0xf]
    %v737 = vld [vmem:[#allocation10 + $0x38] sm:$0xf]
    %v738 = vld [vmem:[#allocation10 + $0x3c] sm:$0xf]
    %v739 = vld [vmem:[%s8] sm:$0x1]
    %v741 = vlaneseq
    %v742 = vshrl.u32 %v741, 7
    %v743 = vsub.s32 0, %v742
    %v744 = vrot.slane %v739, %v743
    %v762 = vunpack.c.l.b16 %v723
    %v763 = vunpack.c.l.b16 %v724
    %v764 = vunpack.c.l.b16 %v725
    %v765 = vunpack.c.l.b16 %v726
    %v766 = vunpack.c.l.b16 %v727
    %v767 = vunpack.c.l.b16 %v728
    %v768 = vunpack.c.l.b16 %v729
    %v769 = vunpack.c.l.b16 %v730
    %v770 = vunpack.c.l.b16 %v731
    %v771 = vunpack.c.l.b16 %v732
    %v772 = vunpack.c.l.b16 %v733
    %v773 = vunpack.c.l.b16 %v734
    %v774 = vunpack.c.l.b16 %v735
    %v775 = vunpack.c.l.b16 %v736
    %v776 = vunpack.c.l.b16 %v737
    %v777 = vunpack.c.l.b16 %v738
    %v778 = vpack.c.b16 %v763, %v762
    %v779 = vpack.c.b16 %v765, %v764
    %v780 = vpack.c.b16 %v767, %v766
    %v781 = vpack.c.b16 %v769, %v768
    %v782 = vpack.c.b16 %v771, %v770
    %v783 = vpack.c.b16 %v773, %v772
    %v784 = vpack.c.b16 %v775, %v774
    %v785 = vpack.c.b16 %v777, %v776
    %794 = vmatprep.subr.bf16.mxu0 0
    %795 = vmatpush1.bf16.msra.mxu0 %v778
    %796 = vmatprep.subr.bf16.mxu0 0
    %797 = vmatpush1.bf16.msra.mxu0 %v779
    %798 = vmatprep.subr.bf16.mxu0 0
    %799 = vmatpush1.bf16.msra.mxu0 %v780
    %800 = vmatprep.subr.bf16.mxu0 0
    %801 = vmatpush1.bf16.msra.mxu0 %v781
    %802 = vmatprep.subr.bf16.mxu0 0
    %803 = vmatpush1.bf16.msra.mxu0 %v782
    %804 = vmatprep.subr.bf16.mxu0 0
    %805 = vmatpush1.bf16.msra.mxu0 %v783
    %806 = vmatprep.subr.bf16.mxu0 0
    %807 = vmatpush1.bf16.msra.mxu0 %v784
    %808 = vmatprep.subr.bf16.mxu0 0
    %809 = vmatpush1.bf16.msra.mxu0 %v785
    %810 = vmatprep.subr.bf16.mxu0 0
    %811 = vmatpush1.bf16.msra.mxu0 0
    %812 = vmatprep.subr.bf16.mxu0 0
    %813 = vmatpush1.bf16.msra.mxu0 0
    %814 = vmatprep.subr.bf16.mxu0 0
    %815 = vmatpush1.bf16.msra.mxu0 0
    %816 = vmatprep.subr.bf16.mxu0 0
    %817 = vmatpush1.bf16.msra.mxu0 0
    %818 = vmatprep.subr.bf16.mxu0 0
    %819 = vmatpush1.bf16.msra.mxu0 0
    %820 = vmatprep.subr.bf16.mxu0 0
    %821 = vmatpush1.bf16.msra.mxu0 0
    %822 = vmatprep.subr.bf16.mxu0 0
    %823 = vmatpush1.bf16.msra.mxu0 0
    %824 = vmatprep.subr.bf16.mxu0 0
    %825 = vmatpush1.bf16.msra.mxu0 0
    %826 = vmatprep.mubr.bf16.mxu0 0
    %827 = vmatmul.mubr.bf16.gmra.mrb[0].mxu0 %v722
    %v828 = vpop.f32.mrb[0].mxu0
    %v829 = vadd.f32 %v744, %v828
    %v830 = vpop.f32.mrb[0].mxu0
    %v831 = vpop.f32.mrb[0].mxu0
    %v832 = vadd.f32 %v744, %v831
    %v833 = vpop.f32.mrb[0].mxu0
    %834 = vdwg.mxu0
    %v835 = vmax.f32 %v829, 0.0
    %v836 = vmax.f32 %v832, 0.0
    %v837 = vpack.c.bf16 %v836, %v835
    %v838 = vld [vmem:[#allocation11] sm:$0xf]
    %v839 = vld [vmem:[#allocation11 + $0x4] sm:$0xf]
    %v840 = vld [vmem:[#allocation11 + $0x8] sm:$0xf]
    %v841 = vld [vmem:[#allocation11 + $0xc] sm:$0xf]
    %v842 = vld [vmem:[#allocation11 + $0x10] sm:$0xf]
    %v843 = vld [vmem:[#allocation11 + $0x14] sm:$0xf]
    %v844 = vld [vmem:[#allocation11 + $0x18] sm:$0xf]
    %v845 = vld [vmem:[#allocation11 + $0x1c] sm:$0xf]
    %v846 = vld [vmem:[#allocation11 + $0x20] sm:$0xf]
    %v847 = vld [vmem:[#allocation11 + $0x24] sm:$0xf]
    %v848 = vld [vmem:[#allocation11 + $0x28] sm:$0xf]
    %v849 = vld [vmem:[#allocation11 + $0x2c] sm:$0xf]
    %v850 = vld [vmem:[#allocation11 + $0x30] sm:$0xf]
    %v851 = vld [vmem:[#allocation11 + $0x34] sm:$0xf]
    %v852 = vld [vmem:[#allocation11 + $0x38] sm:$0xf]
    %v853 = vld [vmem:[#allocation11 + $0x3c] sm:$0xf]
    %v854 = vld [vmem:[%s10] sm:$0x1]
    %v856 = vlaneseq
    %v857 = vshrl.u32 %v856, 7
    %v858 = vsub.s32 0, %v857
    %v859 = vrot.slane %v854, %v858
    %v877 = vunpack.c.l.b16 %v838
    %v878 = vunpack.c.l.b16 %v839
    %v879 = vunpack.c.l.b16 %v840
    %v880 = vunpack.c.l.b16 %v841
    %v881 = vunpack.c.l.b16 %v842
    %v882 = vunpack.c.l.b16 %v843
    %v883 = vunpack.c.l.b16 %v844
    %v884 = vunpack.c.l.b16 %v845
    %v885 = vunpack.c.l.b16 %v846
    %v886 = vunpack.c.l.b16 %v847
    %v887 = vunpack.c.l.b16 %v848
    %v888 = vunpack.c.l.b16 %v849
    %v889 = vunpack.c.l.b16 %v850
    %v890 = vunpack.c.l.b16 %v851
    %v891 = vunpack.c.l.b16 %v852
    %v892 = vunpack.c.l.b16 %v853
    %v893 = vpack.c.b16 %v878, %v877
    %v894 = vpack.c.b16 %v880, %v879
    %v895 = vpack.c.b16 %v882, %v881
    %v896 = vpack.c.b16 %v884, %v883
    %v897 = vpack.c.b16 %v886, %v885
    %v898 = vpack.c.b16 %v888, %v887
    %v899 = vpack.c.b16 %v890, %v889
    %v900 = vpack.c.b16 %v892, %v891
    %909 = vmatprep.subr.bf16.mxu0 0
    %910 = vmatpush1.bf16.msra.mxu0 %v893
    %911 = vmatprep.subr.bf16.mxu0 0
    %912 = vmatpush1.bf16.msra.mxu0 %v894
    %913 = vmatprep.subr.bf16.mxu0 0
    %914 = vmatpush1.bf16.msra.mxu0 %v895
    %915 = vmatprep.subr.bf16.mxu0 0
    %916 = vmatpush1.bf16.msra.mxu0 %v896
    %917 = vmatprep.subr.bf16.mxu0 0
    %918 = vmatpush1.bf16.msra.mxu0 %v897
    %919 = vmatprep.subr.bf16.mxu0 0
    %920 = vmatpush1.bf16.msra.mxu0 %v898
    %921 = vmatprep.subr.bf16.mxu0 0
    %922 = vmatpush1.bf16.msra.mxu0 %v899
    %923 = vmatprep.subr.bf16.mxu0 0
    %924 = vmatpush1.bf16.msra.mxu0 %v900
    %925 = vmatprep.subr.bf16.mxu0 0
    %926 = vmatpush1.bf16.msra.mxu0 0
    %927 = vmatprep.subr.bf16.mxu0 0
    %928 = vmatpush1.bf16.msra.mxu0 0
    %929 = vmatprep.subr.bf16.mxu0 0
    %930 = vmatpush1.bf16.msra.mxu0 0
    %931 = vmatprep.subr.bf16.mxu0 0
    %932 = vmatpush1.bf16.msra.mxu0 0
    %933 = vmatprep.subr.bf16.mxu0 0
    %934 = vmatpush1.bf16.msra.mxu0 0
    %935 = vmatprep.subr.bf16.mxu0 0
    %936 = vmatpush1.bf16.msra.mxu0 0
    %937 = vmatprep.subr.bf16.mxu0 0
    %938 = vmatpush1.bf16.msra.mxu0 0
    %939 = vmatprep.subr.bf16.mxu0 0
    %940 = vmatpush1.bf16.msra.mxu0 0
    %941 = vmatprep.mubr.bf16.mxu0 0
    %942 = vmatmul.mubr.bf16.gmra.mrb[0].mxu0 %v837
    %v943 = vpop.f32.mrb[0].mxu0
    %v944 = vadd.f32 %v859, %v943
    %v945 = vpop.f32.mrb[0].mxu0
    %v946 = vpop.f32.mrb[0].mxu0
    %v947 = vadd.f32 %v859, %v946
    %v948 = vpop.f32.mrb[0].mxu0
    %949 = vdwg.mxu0
    %vm950 = vcmask 72704
    %951 = vst.msk [vmem:[#allocation13] sm:$0xff] %vm950, %v944
    %952 = vst.msk [vmem:[#allocation13 + $0x8] sm:$0xff] %vm950, %v947
    // Predicated region
    $region70: #{tpu_custom_call.1} parent=1 // pred_check
      _
    $region71: #{tpu_custom_call.1} parent=1 // pred_check_branch
      %954 = sbr.rel (0) target = $region73
    $region72: #{tpu_custom_call.1} parent=1 // pred_region
      %s956 = ssub.s32 256, 256
      %957 = vsyncadd [#allocation4], %s956
      %s958 = sshll.u32 [#allocation13], 4
      %s959 = int_to_ptr.vmem [resolvable:$true] %s958
      %964 = dma.vmem_to_hbm [thread:$0]  %s959, 256, %s11, [#allocation4], 128, 128, 8
    $region73: #{tpu_custom_call.1} parent=1 // pred_fallthru
      _
    // Predicated region
    $region74: #{tpu_custom_call.1} parent=1 // pred_check
      _
    $region75: #{tpu_custom_call.1} parent=1 // pred_check_branch
      %966 = sbr.rel (0) target = $region77
    $region76: #{tpu_custom_call.1} parent=1 // pred_region
      %967 = dma.done [#allocation4], 256
    $region77: #{tpu_custom_call.1} parent=1 // pred_fallthru
      _
    %968 = vsyncpa [#allocation3], 1
    %969 = vsyncpa [#allocation6], 1
    %970 = vsyncpa [#allocation9], 1
    %971 = vsyncpa [#allocation12], 1
    %972 = vsyncpa [#allocation4], 1

</llo_original>
